<compile_context>
chip_gen: v7x
topology: tpu7x:2x2x1
jax: 0.10.0
libtpu: 0.0.40
codegen_flags: <defaults>
</compile_context>

<pallas_src>
import functools

import jax
import jax.numpy as jnp
import numpy as np
from jax.experimental import pallas as pl
from jax.experimental.pallas import tpu as pltpu


# ----------------------------------------------------------------------------
# Helpers
# ----------------------------------------------------------------------------
def _round_up(x, m):
    return (x + m - 1) // m * m


def _largest_divisor(x, candidates):
    for c in candidates:
        if x % c == 0:
            return c
    return None


@functools.lru_cache(maxsize=None)
def _vmem_cap_bytes():
    """Generation-aware upper bound for the scoped-VMEM request."""
    cap = None
    try:
        cap = getattr(pltpu.get_tpu_info(), "vmem_capacity_bytes", None)
    except Exception:
        cap = None
    if not cap:
        cap = 128 * 1024 * 1024
    return int(min(cap * 3 // 4, 96 * 1024 * 1024))


def _compiler_params(semantics, working_set_bytes):
    """Scoped-VMEM request sized from the actual per-step working set."""
    limit = int(4 * working_set_bytes + (8 << 20))   # 2x double-buffer + slack
    limit = max(32 << 20, limit)
    limit = min(limit, _vmem_cap_bytes())
    return pltpu.CompilerParams(dimension_semantics=semantics,
                                vmem_limit_bytes=limit)


def _fold_conv_bn(w_oihw, gamma, beta, mean, var, eps=1e-5):
    """Fold inference BatchNorm into the conv: (scaled weights f32, bias f32)."""
    scale = gamma / jnp.sqrt(var + eps)
    w_scaled = (w_oihw * scale[:, None, None, None]).astype(jnp.float32)
    bias = (beta - mean * scale).reshape(1, -1).astype(jnp.float32)
    return w_scaled, bias


def _pad_matrix(w, k_p, n_p):
    k, n = w.shape
    return jnp.pad(w, ((0, k_p - k), (0, n_p - n))).astype(jnp.bfloat16)


def _pad_bias(b, n_p):
    return jnp.pad(b, ((0, 0), (0, n_p - b.shape[1]))).astype(jnp.float32)


# ----------------------------------------------------------------------------
# Kernel 1: fused  X@W  (+ Xr@Wr)  + bias  (+ residual)  [ReLU]
#   - used for the 1x1 convs; conv3 + downsample-conv share one kernel.
# ----------------------------------------------------------------------------
def _matmul_bn_kernel(*refs, relu, has_res_mm, has_res_add):
    it = iter(refs)
    x_ref = next(it)
    w_ref = next(it)
    xr_ref = next(it) if has_res_mm else None
    wr_ref = next(it) if has_res_mm else None
    r_ref = next(it) if has_res_add else None
    b_ref = next(it)
    o_ref = next(it)

    y = jnp.dot(x_ref[...], w_ref[...], preferred_element_type=jnp.float32)
    if has_res_mm:
        y = y + jnp.dot(xr_ref[...], wr_ref[...],
                        preferred_element_type=jnp.float32)
    y = y + b_ref[...]
    if has_res_add:
        y = y + r_ref[...].astype(jnp.float32)
    if relu:
        y = jnp.maximum(y, 0.0)
    o_ref[...] = y.astype(o_ref.dtype)


def fused_matmul_bn(x, w, bias, *, x_res=None, w_res=None, residual=None,
                    relu=True, out_dtype=jnp.float32):
    """x:(M,K) bf16, w:(K,N) bf16 (N % 128 == 0), bias:(1,N) f32.
    Optional second matmul (x_res@w_res, fused downsample) or additive bf16
    residual.  Padded M rows (if any) get bias+ReLU too, then are sliced off
    (harmless)."""
    assert (x_res is None) == (w_res is None)
    m, k = x.shape
    n = w.shape[1]
    assert n % 128 == 0, "output channels must be padded to a multiple of 128"

    m_pad = _round_up(m, 8)
    if m_pad != m:
        pad = ((0, m_pad - m), (0, 0))
        x = jnp.pad(x, pad)
        if x_res is not None:
            x_res = jnp.pad(x_res, pad)
        if residual is not None:
            residual = jnp.pad(residual, pad)

    # v5e-safe tile caps (256 also matches the 256-wide MXU on v6e/v7x).
    tm = _largest_divisor(m_pad, (256, 128, 64, 32, 16, 8))
    tn = _largest_divisor(n, (256, 128))
    # Ensure the (parallel) grid has >= 2 steps so both v7x TensorCores work.
    while (m_pad // tm) * (n // tn) < 2:
        if tm > 8:
            tm //= 2
        elif tn > 128:
            tn //= 2
        else:
            break
    grid = (m_pad // tm, n // tn)

    in_specs = [pl.BlockSpec((tm, k), lambda i, j: (i, 0)),
                pl.BlockSpec((k, tn), lambda i, j: (0, j))]
    args = [x, w]
    ws = tm * k * 2 + k * tn * 2
    if x_res is not None:
        kr = x_res.shape[1]
        in_specs += [pl.BlockSpec((tm, kr), lambda i, j: (i, 0)),
                     pl.BlockSpec((kr, tn), lambda i, j: (0, j))]
        args += [x_res, w_res]
        ws += tm * kr * 2 + kr * tn * 2
    if residual is not None:
        in_specs.append(pl.BlockSpec((tm, tn), lambda i, j: (i, j)))
        args.append(residual)
        ws += tm * tn * residual.dtype.itemsize
    in_specs.append(pl.BlockSpec((1, tn), lambda i, j: (0, j)))
    args.append(bias)
    ws += tn * 4
    ws += tm * tn * (4 + np.dtype(out_dtype).itemsize)   # f32 epilogue + out

    kernel = functools.partial(_matmul_bn_kernel, relu=relu,
                               has_res_mm=x_res is not None,
                               has_res_add=residual is not None)

    out = pl.pallas_call(
        kernel,
        grid=grid,
        in_specs=in_specs,
        out_specs=pl.BlockSpec((tm, tn), lambda i, j: (i, j)),
        out_shape=jax.ShapeDtypeStruct((m_pad, n), out_dtype),
        compiler_params=_compiler_params(("parallel", "parallel"), ws),
    )(*args)

    if m_pad != m:
        out = out[:m]
    return out


# ----------------------------------------------------------------------------
# Kernel 2: 3x3 conv (stride 1 or 2, pad 1) + BN(bias) + ReLU
#   The padded image is flattened (rows*padded_width, ci) in the wrapper; each
#   of the 9 taps is a contiguous row-window dot into an f32 accumulator.
#   Halo columns are over-computed and discarded by the wrapper slice.
# ----------------------------------------------------------------------------
def _conv3x3_kernel(*refs, taps, mo, n_phases):
    phase_refs = refs[:n_phases]
    w_ref, b_ref, o_ref = refs[n_phases:]
    co = w_ref.shape[-1]

    acc = jnp.zeros((mo, co), jnp.float32)
    for t, (ph, off) in enumerate(taps):
        x = phase_refs[ph][0, 0, off:off + mo, :]     # contiguous row window
        acc = acc + jnp.dot(x, w_ref[t], preferred_element_type=jnp.float32)

    y = jnp.maximum(acc + b_ref[...], 0.0)
    o_ref[0, 0, :, :] = y.astype(o_ref.dtype)


def _pick_row_tile(h, wp, n, max_rows=2048):
    """Largest divisor th of h with th*wp <= max_rows (caps the f32 acc)."""
    th = h
    if h * wp > max_rows:
        th = 1
        for cand in range(1, h + 1):
            if h % cand == 0 and cand * wp <= max_rows:
                th = cand
    # Give the pipeline / both TensorCores at least 2 grid steps if possible.
    if n * (h // th) < 2:
        for cand in range(h // 2, 0, -1):
            if h % cand == 0:
                th = cand
                break
    return th


def conv3x3_bn_relu(y1, w9_p, bias_p, stride):
    """y1: (n,h,w,ci_p) bf16.  w9_p: (9,ci_p,co_p) bf16.  bias_p: (1,co_p) f32.
    Returns ((n*ho*wo, co_p) bf16, ho, wo)."""
    n, h, w, ci_p = y1.shape
    co_p = w9_p.shape[-1]

    if stride == 1:
        ho, wo = h, w
        wp = _round_up(w + 2, 8)               # lane-friendly padded width
        th = _pick_row_tile(h, wp, n)
        nt = h // th
        # rows: 1 top + (1 halo + 1 slack) bottom; cols: 1 left + rest right.
        xp = jnp.pad(y1, ((0, 0), (1, 2), (1, wp - w - 1), (0, 0)))
        if nt == 1:
            xt = xp[:, None]
        else:
            xt = jnp.stack([xp[:, t * th: t * th + th + 3] for t in range(nt)],
                           axis=1)             # halo-duplicated row tiles
        phases = [xt.reshape(n, nt, (th + 3) * wp, ci_p)]
        taps = tuple((0, kh * wp + kw) for kh in range(3) for kw in range(3))
        mo, wcols = th * wp, wp
    elif stride == 2:
        assert h % 2 == 0 and w % 2 == 0, "stride-2 conv2 needs even H and W"
        ho, wo = h // 2, w // 2
        wq = _round_up(wo + 1, 8)
        nt = 1
        # TODO(synk): also row-tile the stride-2 path (feature maps at ResNet
        #             stride-2 blocks are small, whole-image fits VMEM).
        xp = jnp.pad(y1, ((0, 0), (1, 3), (1, 2 * wq - w - 1), (0, 0)))
        phases = [xp[:, p::2, q::2, :].reshape(n, 1, (ho + 2) * wq, ci_p)
                  for p in (0, 1) for q in (0, 1)]
        taps = tuple((2 * (kh % 2) + (kw % 2), (kh // 2) * wq + (kw // 2))
                     for kh in range(3) for kw in range(3))
        mo, wcols = ho * wq, wq
    else:
        raise NotImplementedError("Bottleneck conv2 stride must be 1 or 2")

    grid = (n, nt)
    in_specs = [pl.BlockSpec((1, 1) + p.shape[2:], lambda b, t: (b, t, 0, 0))
                for p in phases]
    in_specs += [pl.BlockSpec(w9_p.shape, lambda b, t: (0, 0, 0)),
                 pl.BlockSpec((1, co_p), lambda b, t: (0, 0))]

    ws = sum(int(np.prod(p.shape[2:])) * 2 for p in phases)   # bf16 input slabs
    ws += int(np.prod(w9_p.shape)) * 2 + co_p * 4             # weights + bias
    ws += mo * co_p * (2 + 4)                                 # bf16 out + f32 acc

    kernel = functools.partial(_conv3x3_kernel, taps=taps, mo=mo,
                               n_phases=len(phases))

    out = pl.pallas_call(
        kernel,
        grid=grid,
        in_specs=in_specs,
        out_specs=pl.BlockSpec((1, 1, mo, co_p), lambda b, t: (b, t, 0, 0)),
        out_shape=jax.ShapeDtypeStruct((n, nt, mo, co_p), jnp.bfloat16),
        compiler_params=_compiler_params(("parallel", "parallel"), ws),
    )(*phases, w9_p, bias_p)

    out = out.reshape(n, ho, wcols, co_p)[:, :, :wo, :]
    return out.reshape(n * ho * wo, co_p), ho, wo


# ----------------------------------------------------------------------------
# Bottleneck forward (eval-mode BN folded), NCHW in / NCHW out
# ----------------------------------------------------------------------------
def bottleneck_forward(x_nchw, params, stride=1, downsample=False):
    n, cin, h, w = x_nchw.shape
    cmid = params["w1"].shape[0]
    cout = params["w3"].shape[0]
    cin_p, cmid_p, cout_p = (_round_up(c, 128) for c in (cin, cmid, cout))

    x = jnp.transpose(x_nchw, (0, 2, 3, 1)).astype(jnp.float32)        # NHWC
    x_bf = jnp.pad(x, ((0, 0), (0, 0), (0, 0),
                       (0, cin_p - cin))).astype(jnp.bfloat16)

    # conv1 (1x1) + bn1 + relu
    w1s, b1 = _fold_conv_bn(params["w1"], params["g1"], params["b1"],
                            params["m1"], params["v1"])
    w1m = _pad_matrix(w1s.reshape(cmid, cin).T, cin_p, cmid_p)
    y1 = fused_matmul_bn(x_bf.reshape(n * h * w, cin_p), w1m,
                         _pad_bias(b1, cmid_p),
                         relu=True, out_dtype=jnp.bfloat16)
    y1 = y1.reshape(n, h, w, cmid_p)

    # conv2 (3x3, stride, pad=1) + bn2 + relu — contiguous-row-window taps
    w2s, b2 = _fold_conv_bn(params["w2"], params["g2"], params["b2"],
                            params["m2"], params["v2"])
    w9 = jnp.transpose(w2s, (2, 3, 1, 0)).reshape(9, cmid, cmid)
    w9 = jnp.pad(w9, ((0, 0), (0, cmid_p - cmid),
                      (0, cmid_p - cmid))).astype(jnp.bfloat16)
    y2, ho, wo = conv3x3_bn_relu(y1, w9, _pad_bias(b2, cmid_p), stride)

    # conv3 (1x1) + bn3 + (fused downsample conv | bf16 identity) + relu
    w3s, b3 = _fold_conv_bn(params["w3"], params["g3"], params["b3"],
                            params["m3"], params["v3"])
    w3m = _pad_matrix(w3s.reshape(cout, cmid).T, cmid_p, cout_p)
    b3p = _pad_bias(b3, cout_p)

    if downsample:
        wds, bd = _fold_conv_bn(params["wd"], params["gd"], params["bd"],
                                params["md"], params["vd"])
        wdm = _pad_matrix(wds.reshape(cout, cin).T, cin_p, cout_p)
        # TODO(synk): the stride-2 subsample is still a wrapper slice.
        xs = x_bf[:, ::stride, ::stride, :].reshape(n * ho * wo, cin_p)
        y3 = fused_matmul_bn(y2, w3m, b3p + _pad_bias(bd, cout_p),
                             x_res=xs, w_res=wdm, relu=True,
                             out_dtype=jnp.float32)
    else:
        ident = x_bf[:, ::stride, ::stride, :]
        if cin_p != cout_p:      # only meaningful when cin == cout; keep legal
            ident = (ident[..., :cout_p] if cin_p > cout_p else
                     jnp.pad(ident, ((0, 0),) * 3 + ((0, cout_p - cin_p),)))
        ident = ident.reshape(n * ho * wo, cout_p)
        y3 = fused_matmul_bn(y2, w3m, b3p, residual=ident,
                             relu=True, out_dtype=jnp.float32)

    y3 = y3.reshape(n, ho, wo, cout_p)[:, :, :, :cout]
    return jnp.transpose(y3, (0, 3, 1, 2))                             # NCHW


# ----------------------------------------------------------------------------
# Pure-JAX reference mirroring the bf16-operand / f32-accumulate math
# ----------------------------------------------------------------------------
def reference_forward(x_nchw, params, stride, downsample):
    x = jnp.transpose(x_nchw, (0, 2, 3, 1)).astype(jnp.float32)
    xb = x.astype(jnp.bfloat16)

    def conv(inp_bf16, w_scaled_f32, strides, padding):
        w_hwio = jnp.transpose(w_scaled_f32, (2, 3, 1, 0)).astype(jnp.bfloat16)
        return jax.lax.conv_general_dilated(
            inp_bf16, w_hwio, window_strides=strides, padding=padding,
            dimension_numbers=("NHWC", "HWIO", "NHWC"),
            preferred_element_type=jnp.float32)

    w1s, b1 = _fold_conv_bn(params["w1"], params["g1"], params["b1"],
                            params["m1"], params["v1"])
    y1 = jax.nn.relu(conv(xb, w1s, (1, 1), "VALID") + b1).astype(jnp.bfloat16)

    w2s, b2 = _fold_conv_bn(params["w2"], params["g2"], params["b2"],
                            params["m2"], params["v2"])
    y2 = jax.nn.relu(conv(y1, w2s, (stride, stride), ((1, 1), (1, 1))) + b2)
    y2 = y2.astype(jnp.bfloat16)

    w3s, b3 = _fold_conv_bn(params["w3"], params["g3"], params["b3"],
                            params["m3"], params["v3"])
    y3 = conv(y2, w3s, (1, 1), "VALID") + b3

    if downsample:
        wds, bd = _fold_conv_bn(params["wd"], params["gd"], params["bd"],
                                params["md"], params["vd"])
        ident = conv(xb, wds, (stride, stride), "VALID") + bd
    else:
        ident = xb[:, ::stride, ::stride, :].astype(jnp.float32)
    y = jax.nn.relu(y3 + ident)
    return jnp.transpose(y, (0, 3, 1, 2))


# ----------------------------------------------------------------------------
if __name__ == "__main__":
    def rnd(k, shape, scale=0.1):
        return jax.random.normal(k, shape, dtype=jnp.float32) * scale

    def make_params(key, cin, cmid, cout, downsample):
        keys = jax.random.split(key, 20)
        p = {
            "w1": rnd(keys[0], (cmid, cin, 1, 1)),
            "g1": 1.0 + rnd(keys[1], (cmid,)), "b1": rnd(keys[2], (cmid,)),
            "m1": rnd(keys[3], (cmid,)), "v1": 1.0 + jnp.abs(rnd(keys[4], (cmid,))),
            "w2": rnd(keys[5], (cmid, cmid, 3, 3)),
            "g2": 1.0 + rnd(keys[6], (cmid,)), "b2": rnd(keys[7], (cmid,)),
            "m2": rnd(keys[8], (cmid,)), "v2": 1.0 + jnp.abs(rnd(keys[9], (cmid,))),
            "w3": rnd(keys[10], (cout, cmid, 1, 1)),
            "g3": 1.0 + rnd(keys[11], (cout,)), "b3": rnd(keys[12], (cout,)),
            "m3": rnd(keys[13], (cout,)), "v3": 1.0 + jnp.abs(rnd(keys[14], (cout,))),
        }
        if downsample:
            p.update({
                "wd": rnd(keys[15], (cout, cin, 1, 1)),
                "gd": 1.0 + rnd(keys[16], (cout,)), "bd": rnd(keys[17], (cout,)),
                "md": rnd(keys[18], (cout,)), "vd": 1.0 + jnp.abs(rnd(keys[19], (cout,))),
            })
        return p

    root = jax.random.PRNGKey(0)
    k1, k2, kx1, kx2 = jax.random.split(root, 4)

    # Case 1: Bottleneck(in=16, out=8, stride=2, downsample=True) -> cout=32
    n, cin, h, w, cmid, stride = 2, 16, 8, 8, 8, 2
    cout = 4 * cmid
    params1 = make_params(k1, cin, cmid, cout, downsample=True)
    x1 = jax.random.normal(kx1, (n, cin, h, w), dtype=jnp.float32)
    out1 = jax.block_until_ready(
        bottleneck_forward(x1, params1, stride=stride, downsample=True))
    ref1 = reference_forward(x1, params1, stride, True)
    np.testing.assert_allclose(np.asarray(out1), np.asarray(ref1),
                               rtol=2e-3, atol=2e-3)
    assert out1.shape == (n, cout, h // stride, w // stride)

    # Case 2: Bottleneck(in=32, out=8, stride=1, downsample=False) -> identity
    cin2 = 4 * cmid
    params2 = make_params(k2, cin2, cmid, cout, downsample=False)
    x2 = jax.random.normal(kx2, (n, cin2, h, w), dtype=jnp.float32)
    out2 = jax.block_until_ready(
        bottleneck_forward(x2, params2, stride=1, downsample=False))
    ref2 = reference_forward(x2, params2, 1, False)
    np.testing.assert_allclose(np.asarray(out2), np.asarray(ref2),
                               rtol=2e-3, atol=2e-3)
    assert out2.shape == (n, cout, h, w)

    print("KERNEL_OK")
</pallas_src>

<mosaic_0001>
module attributes {stable_mosaic.version = 11 : i64} {
  func.func @_matmul_bn_kernel(%arg0: i32, %arg1: i32, %arg2: memref<64x128xbf16, #tpu.memory_space<vmem>>, %arg3: memref<128x128xbf16, #tpu.memory_space<vmem>>, %arg4: memref<1x128xf32, #tpu.memory_space<vmem>>, %arg5: memref<64x128xbf16, #tpu.memory_space<vmem>>) attributes {dimension_semantics = [#tpu.dimension_semantics<parallel>, #tpu.dimension_semantics<parallel>], iteration_bounds = array<i64: 2, 1>, scalar_prefetch = 0 : i64, scratch_operands = 0 : i64, tpu.core_type = #tpu.core_type<tc>, window_params = [{transform_indices = @transform_0, window_bounds = array<i64: 64, 128>}, {transform_indices = @transform_1, window_bounds = array<i64: 128, 128>}, {transform_indices = @transform_2, window_bounds = array<i64: 1, 128>}, {transform_indices = @transform_3, window_bounds = array<i64: 64, 128>}]} {
    %c0 = arith.constant 0 : index
    %c0_0 = arith.constant 0 : index
    %0 = vector.load %arg2[%c0, %c0_0] : memref<64x128xbf16, #tpu.memory_space<vmem>>, vector<64x128xbf16>
    %c0_1 = arith.constant 0 : index
    %c0_2 = arith.constant 0 : index
    %1 = vector.load %arg3[%c0_1, %c0_2] : memref<128x128xbf16, #tpu.memory_space<vmem>>, vector<128x128xbf16>
    %cst = arith.constant dense<0.000000e+00> : vector<64x128xf32>
    %2 = tpu.matmul %0, %1, %cst {dimension_numbers = #tpu.dot_dimension_numbers<[1], [0], [0], [1], [0, 0, 1, 1], [], []>} : vector<64x128xbf16>, vector<128x128xbf16>, vector<64x128xf32> -> vector<64x128xf32>
    %c0_3 = arith.constant 0 : index
    %c0_4 = arith.constant 0 : index
    %3 = vector.load %arg4[%c0_3, %c0_4] : memref<1x128xf32, #tpu.memory_space<vmem>>, vector<1x128xf32>
    %4 = vector.broadcast %3 : vector<1x128xf32> to vector<64x128xf32>
    %5 = arith.addf %2, %4 : vector<64x128xf32>
    %cst_5 = arith.constant 0.000000e+00 : f32
    %6 = vector.broadcast %cst_5 : f32 to vector<64x128xf32>
    %7 = arith.maximumf %5, %6 : vector<64x128xf32>
    %8 = arith.truncf %7 : vector<64x128xf32> to vector<64x128xbf16>
    %c0_6 = arith.constant 0 : index
    %c0_7 = arith.constant 0 : index
    %9 = vector.load %arg5[%c0_6, %c0_7] : memref<64x128xbf16, #tpu.memory_space<vmem>>, vector<64x128xbf16>
    tpu.vector_store %arg5[%c0_6, %c0_7], %8 {strides = array<i32>} : memref<64x128xbf16, #tpu.memory_space<vmem>>, vector<64x128xbf16>,
    return
  }
  func.func @transform_0(%arg0: i32, %arg1: i32) -> (i32, i32) {
    %c0_i32 = arith.constant 0 : i32
    %c0_i32_0 = arith.constant 0 : i32
    return %arg0, %c0_i32 : i32, i32
  }
  func.func @transform_1(%arg0: i32, %arg1: i32) -> (i32, i32) {
    %c0_i32 = arith.constant 0 : i32
    %c0_i32_0 = arith.constant 0 : i32
    return %c0_i32, %arg1 : i32, i32
  }
  func.func @transform_2(%arg0: i32, %arg1: i32) -> (i32, i32) {
    %c0_i32 = arith.constant 0 : i32
    %c0_i32_0 = arith.constant 0 : i32
    return %c0_i32, %arg1 : i32, i32
  }
  func.func @transform_3(%arg0: i32, %arg1: i32) -> (i32, i32) {
    %c0_i32 = arith.constant 0 : i32
    return %arg0, %arg1 : i32, i32
  }
}

</mosaic_0001>

<llo_original>
// kernel: tpu_custom_call.1
$region0: #{tpu_custom_call.1}
  #allocation0 [shape = 'u32[]', space=smem, size = 0x4, offset = 0x4, fixed_abs, tag = 'smem constant byte address 0x4 - core index']
  #allocation1 [shape = 'u32[144,128]{1,0:T(1,128)}', space=vmem, size = 0x12000, scoped, tag = 'internal scratch']
  %s0 = inlined_call_operand.hbm [shape: bf16[128,128], index: 0, kind: input, shape index: {}]
  %s1 = inlined_call_operand.hbm [shape: bf16[128,128], index: 1, kind: input, shape index: {}]
  %s2 = inlined_call_operand.vmem [shape: f32[1,128], index: 2, kind: input, shape index: {}]
  %s3 = inlined_call_operand.hbm [shape: bf16[128,128], index: 3, kind: output, shape index: {}]
  %s4 = sld [smem:[#allocation0]]
  $region53: #{tpu_custom_call.1} parent=0
    _
  %s6 = ssub.s32 1, %s4
  %s7 = scalar_select 0, %s6, %s4
  $region1: #{tpu_custom_call.1} parent=0
    #allocation2 [shape = 'u8[32768]{0}', space=vmem, size = 0x8000, scoped, tag = 'input window, operand 0']
    #allocation3 [shape = 's32[2]{0}', space=sflag, size = 0x8, scoped, tag = 'scoped memory for tpu_custom_call.1']
    #allocation4 [shape = 's32[2]{0}', space=sflag, size = 0x8, scoped, tag = 'scoped memory for tpu_custom_call.1']
    #allocation5 [shape = 'u8[32768]{0}', space=vmem, size = 0x8000, scoped, tag = 'input window, operand 1, single buffered']
    #allocation6 [shape = 's32[1]{0}', space=sflag, size = 0x4, scoped, tag = 'scoped memory for tpu_custom_call.1']
    #allocation7 [shape = 'u8[32768]{0}', space=vmem, size = 0x8000, scoped, tag = 'output window, operand 0']
    %8 = vsyncpa [#allocation3], 0
    %s9 = scalar_lea.sflag [#allocation3], 1
    %10 = vsyncpa %s9, 0
    %11 = vsyncpa [#allocation6], 0
    %12 = vsyncpa [#allocation4], 0
    %s13 = scalar_lea.sflag [#allocation4], 1
    %14 = vsyncpa %s13, 0
    loop: start=0, step=1, limit=4
    $region2: #{tpu_custom_call.1} parent=1 // loop_pre_header
      _
    $region3: #{tpu_custom_call.1} parent=1 // loop_header
      %s16 = sphi 0, %s20
      %p17 = scmp.ge.s32.totalorder %s16, 4
      %s23 = sphi 0, %s35
      %s24 = sphi 0, %s31
      %s25 = sphi 0, %s23
      %s26 = sphi 0, %s24
      %s27 = sphi 0, %s25
      %s28 = sphi 0, %s26
      %s38 = sphi 0, %s40
      %s41 = sphi 0, %s38
      %s42 = sphi 0, %s41
      %s58 = sphi 0, %s42
      %s64 = sphi 0, %s66
      %s67 = sphi 0, %s64
      %s68 = sphi 0, %s67
      %s84 = sphi 0, %s68
      %s90 = sphi 0, %s92
      %s93 = sphi 0, %s90
      %s94 = sphi 0, %s93
      %s110 = sphi 0, %s94
      %s118 = sphi 0, %s120
      %s121 = sphi 0, %s118
      %s122 = sphi 0, %s121
      %s138 = sphi 0, %s122
    $region4: #{tpu_custom_call.1} parent=1 // loop_header_branch
      %19 = sbr.rel (%p17) target = $region8
    $region5: #{tpu_custom_call.1} parent=1 // loop_body
      %s21 = ssub.s32 %s16, 1
      %s22 = ssub.s32 %s16, 2
      %s29 = sadd.s32 1, %s24
      %p30 = scmp.ge.s32.totalorder %s29, 1
      %s31 = scalar_select %p30, 0, %s29
      %s32 = sadd.s32 1, %s23
      %s33 = scalar_select %p30, %s32, %s23
      %p34 = scmp.ge.s32.totalorder %s33, 2
      %s35 = scalar_select %p34, 0, %s33
      %s36 = ssub.s32 %s23, %s35
      %p37 = scmp.eq.s32.totalorder %s36, 0
      %s39 = sadd.s32 %s38, 1
      %s40 = scalar_select %p37, %s38, %s39
      %p43 = pneg %p37
      %p44 = scmp.eq.s32.totalorder %s16, 1
      %p45 = por %p43, %p44
      %p46 = scmp.ne.s32.totalorder %s38, %s41
      %p47 = scmp.eq.s32.totalorder %s16, 0
      %p48 = por %p46, %p47
      %p49 = scmp.ne.s32.totalorder %s38, %s41
      %p50 = scmp.eq.s32.totalorder %s21, 1
      %p51 = por %p49, %p50
      %p52 = scmp.ne.s32.totalorder %s41, %s42
      %p53 = scmp.eq.s32.totalorder %s21, 0
      %p54 = por %p52, %p53
      %p55 = scmp.ne.s32.totalorder %s41, %s42
      %p56 = scmp.eq.s32.totalorder %s22, 1
      %p57 = por %p55, %p56
      %p59 = scmp.ne.s32.totalorder %s42, %s58
      %p60 = scmp.eq.s32.totalorder %s22, 0
      %p61 = por %p59, %p60
      %s62 = ssub.s32 %s24, %s31
      %p63 = scmp.eq.s32.totalorder %s62, 0
      %s65 = sadd.s32 %s64, 1
      %s66 = scalar_select %p63, %s64, %s65
      %p69 = pneg %p63
      %p70 = scmp.eq.s32.totalorder %s16, 1
      %p71 = por %p69, %p70
      %p72 = scmp.ne.s32.totalorder %s64, %s67
      %p73 = scmp.eq.s32.totalorder %s16, 0
      %p74 = por %p72, %p73
      %p75 = scmp.ne.s32.totalorder %s64, %s67
      %p76 = scmp.eq.s32.totalorder %s21, 1
      %p77 = por %p75, %p76
      %p78 = scmp.ne.s32.totalorder %s67, %s68
      %p79 = scmp.eq.s32.totalorder %s21, 0
      %p80 = por %p78, %p79
      %p81 = scmp.ne.s32.totalorder %s67, %s68
      %p82 = scmp.eq.s32.totalorder %s22, 1
      %p83 = por %p81, %p82
      %p85 = scmp.ne.s32.totalorder %s68, %s84
      %p86 = scmp.eq.s32.totalorder %s22, 0
      %p87 = por %p85, %p86
      %s88 = ssub.s32 %s24, %s31
      %p89 = scmp.eq.s32.totalorder %s88, 0
      %s91 = sadd.s32 %s90, 1
      %s92 = scalar_select %p89, %s90, %s91
      %p95 = pneg %p89
      %p96 = scmp.eq.s32.totalorder %s16, 1
      %p97 = por %p95, %p96
      %p98 = scmp.ne.s32.totalorder %s90, %s93
      %p99 = scmp.eq.s32.totalorder %s16, 0
      %p100 = por %p98, %p99
      %p101 = scmp.ne.s32.totalorder %s90, %s93
      %p102 = scmp.eq.s32.totalorder %s21, 1
      %p103 = por %p101, %p102
      %p104 = scmp.ne.s32.totalorder %s93, %s94
      %p105 = scmp.eq.s32.totalorder %s21, 0
      %p106 = por %p104, %p105
      %p107 = scmp.ne.s32.totalorder %s93, %s94
      %p108 = scmp.eq.s32.totalorder %s22, 1
      %p109 = por %p107, %p108
      %p111 = scmp.ne.s32.totalorder %s94, %s110
      %p112 = scmp.eq.s32.totalorder %s22, 0
      %p113 = por %p111, %p112
      %s114 = ssub.s32 %s23, %s35
      %s115 = ssub.s32 %s24, %s31
      %s116 = sor.u32 %s114, %s115
      %p117 = scmp.eq.s32.totalorder %s116, 0
      %s119 = sadd.s32 %s118, 1
      %s120 = scalar_select %p117, %s118, %s119
      %p123 = pneg %p117
      %p124 = scmp.eq.s32.totalorder %s16, 1
      %p125 = por %p123, %p124
      %p126 = scmp.ne.s32.totalorder %s118, %s121
      %p127 = scmp.eq.s32.totalorder %s16, 0
      %p128 = por %p126, %p127
      %p129 = scmp.ne.s32.totalorder %s118, %s121
      %p130 = scmp.eq.s32.totalorder %s21, 1
      %p131 = por %p129, %p130
      %p132 = scmp.ne.s32.totalorder %s121, %s122
      %p133 = scmp.eq.s32.totalorder %s21, 0
      %p134 = por %p132, %p133
      %p135 = scmp.ne.s32.totalorder %s121, %s122
      %p136 = scmp.eq.s32.totalorder %s22, 1
      %p137 = por %p135, %p136
      %p139 = scmp.ne.s32.totalorder %s122, %s138
      %p140 = scmp.eq.s32.totalorder %s22, 0
      %p141 = por %p139, %p140
      %p142 = scmp.le.s32.totalorder 1, %s16
      %p143 = scmp.lt.s32.totalorder %s16, 3
      %p144 = pnand %p142, %p143
      %p145 = pneg %p144
      // Predicated region
      $region9: #{tpu_custom_call.1} parent=5 // pred_check
        _
      $region10: #{tpu_custom_call.1} parent=5 // pred_check_branch
        %147 = sbr.rel (%p144) target = $region12
      $region11: #{tpu_custom_call.1} parent=5 // pred_region
        %s148 = ssub.s32 %s16, 1
        // Predicated region
        $region13: #{tpu_custom_call.1} parent=11 // pred_check
          %p149 = pneg %p80
        $region14: #{tpu_custom_call.1} parent=11 // pred_check_branch
          %151 = sbr.rel (%p149) target = $region16
        $region15: #{tpu_custom_call.1} parent=11 // pred_region
          %s153 = ssub.s32 1024, 1024
          %154 = vsyncadd [#allocation6], %s153
          %s155 = smul.addr %s26, 64
          %s156 = scalar_lea.hbm %s1, %s155
          %s157 = sshll.u32 [#allocation5], 4
          %s158 = int_to_ptr.vmem [resolvable:$true] %s157
          %163 = dma.hbm_to_vmem [thread:$0]  %s156, 1024, %s158, [#allocation6], 64, 64, 4
        $region16: #{tpu_custom_call.1} parent=11 // pred_fallthru
          _
        // Predicated region
        $region17: #{tpu_custom_call.1} parent=11 // pred_check
          %p164 = pneg %p106
        $region18: #{tpu_custom_call.1} parent=11 // pred_check_branch
          %166 = sbr.rel (%p164) target = $region20
        $region19: #{tpu_custom_call.1} parent=11 // pred_region
          %p167 = scmp.lt.s32.totalorder %s26, 0
          %s168 = scalar_select %p167, %s26, 0
          %s169 = scalar_lea.vmem %s2, %s168
        $region20: #{tpu_custom_call.1} parent=11 // pred_fallthru
          _
      $region12: #{tpu_custom_call.1} parent=5 // pred_fallthru
        _
      %p170 = scmp.lt.s32.totalorder %s16, 2
      // Predicated region
      $region21: #{tpu_custom_call.1} parent=5 // pred_check
        %p171 = pneg %p170
      $region22: #{tpu_custom_call.1} parent=5 // pred_check_branch
        %173 = sbr.rel (%p171) target = $region24
      $region23: #{tpu_custom_call.1} parent=5 // pred_region
        // Predicated region
        $region25: #{tpu_custom_call.1} parent=23 // pred_check
          %p174 = pneg %p48
        $region26: #{tpu_custom_call.1} parent=23 // pred_check_branch
          %176 = sbr.rel (%p174) target = $region28
        $region27: #{tpu_custom_call.1} parent=23 // pred_region
          %s177 = sand.u32 %s38, 1
          %s178 = scalar_lea.sflag [#allocation3], %s177
          %s179 = sand.u32 %s38, 1
          %s180 = smul.addr %s179, 32
          %s181 = scalar_lea.vmem [#allocation2], %s180
          %s182 = smul.u32 8, %s23
          %s184 = ssub.s32 512, 512
          %185 = vsyncadd %s178, %s184
          %s186 = smul.addr %s182, 64
          %s187 = scalar_lea.hbm %s0, %s186
          %s188 = sshll.u32 %s181, 4
          %s189 = int_to_ptr.vmem [resolvable:$true] %s188
          %194 = dma.hbm_to_vmem [thread:$0]  %s187, 512, %s189, %s178, 64, 64, 4
        $region28: #{tpu_custom_call.1} parent=23 // pred_fallthru
          _
      $region24: #{tpu_custom_call.1} parent=5 // pred_fallthru
        _
      %p195 = scmp.le.s32.totalorder 1, %s16
      %p196 = scmp.lt.s32.totalorder %s16, 3
      %p197 = pnand %p195, %p196
      %p198 = pneg %p197
      // Predicated region
      $region29: #{tpu_custom_call.1} parent=5 // pred_check
        _
      $region30: #{tpu_custom_call.1} parent=5 // pred_check_branch
        %200 = sbr.rel (%p197) target = $region32
      $region31: #{tpu_custom_call.1} parent=5 // pred_region
        %s201 = ssub.s32 %s16, 1
        %s202 = sand.u32 %s41, 1
        %s203 = scalar_lea.sflag [#allocation3], %s202
        %s204 = sand.u32 %s41, 1
        %s205 = smul.addr %s204, 32
        %s206 = scalar_lea.vmem [#allocation2], %s205
        // Predicated region
        $region33: #{tpu_custom_call.1} parent=31 // pred_check
          %p207 = pneg %p54
        $region34: #{tpu_custom_call.1} parent=31 // pred_check_branch
          %209 = sbr.rel (%p207) target = $region36
        $region35: #{tpu_custom_call.1} parent=31 // pred_region
          %210 = dma.done %s203, 512
        $region36: #{tpu_custom_call.1} parent=31 // pred_fallthru
          _
        // Predicated region
        $region37: #{tpu_custom_call.1} parent=31 // pred_check
          %p211 = pneg %p80
        $region38: #{tpu_custom_call.1} parent=31 // pred_check_branch
          %213 = sbr.rel (%p211) target = $region40
        $region39: #{tpu_custom_call.1} parent=31 // pred_region
          %214 = dma.done [#allocation6], 1024
        $region40: #{tpu_custom_call.1} parent=31 // pred_fallthru
          _
        %s215 = sand.u32 %s41, 1
        %s216 = scalar_lea.sflag [#allocation3], %s215
        %s217 = sand.u32 %s41, 1
        %s218 = smul.addr %s217, 32
        %s219 = scalar_lea.vmem [#allocation2], %s218
        %p220 = pneg %p54
        %p221 = pneg %p51
        %p222 = pneg %p80
        %p223 = pneg %p77
        %p224 = scmp.lt.s32.totalorder %s26, 0
        %s225 = scalar_select %p224, %s26, 0
        %s226 = scalar_lea.vmem %s2, %s225
        %p227 = pneg %p106
        %p228 = pneg %p103
        %p229 = pneg %p134
        %p230 = pneg %p131
        %s231 = sand.u32 %s121, 1
        %s232 = scalar_lea.sflag [#allocation4], %s231
        %s233 = sand.u32 %s121, 1
        %s234 = smul.addr %s233, 32
        %s235 = scalar_lea.vmem [#allocation7], %s234
        %s236 = smul.u32 8, %s25
        %p237 = scmp.lt.s32.totalorder %s26, 0
        %s238 = scalar_select %p237, %s26, 0
        %s239 = scalar_lea.vmem %s2, %s238
        %s240 = smul.u32 8, %s25
        %v242 = vld [vmem:[%s206] sm:$0xf]
        %v243 = vld [vmem:[%s206 + $0x4] sm:$0xf]
        %v244 = vld [vmem:[%s206 + $0x8] sm:$0xf]
        %v245 = vld [vmem:[%s206 + $0xc] sm:$0xf]
        %v246 = vld [vmem:[%s206 + $0x10] sm:$0xf]
        %v247 = vld [vmem:[%s206 + $0x14] sm:$0xf]
        %v248 = vld [vmem:[%s206 + $0x18] sm:$0xf]
        %v249 = vld [vmem:[%s206 + $0x1c] sm:$0xf]
        %v250 = vld [vmem:[#allocation5] sm:$0xf]
        %v251 = vld [vmem:[#allocation5 + $0x4] sm:$0xf]
        %v252 = vld [vmem:[#allocation5 + $0x8] sm:$0xf]
        %v253 = vld [vmem:[#allocation5 + $0xc] sm:$0xf]
        %v254 = vld [vmem:[#allocation5 + $0x10] sm:$0xf]
        %v255 = vld [vmem:[#allocation5 + $0x14] sm:$0xf]
        %v256 = vld [vmem:[#allocation5 + $0x18] sm:$0xf]
        %v257 = vld [vmem:[#allocation5 + $0x1c] sm:$0xf]
        %v258 = vld [vmem:[#allocation5 + $0x20] sm:$0xf]
        %v259 = vld [vmem:[#allocation5 + $0x24] sm:$0xf]
        %v260 = vld [vmem:[#allocation5 + $0x28] sm:$0xf]
        %v261 = vld [vmem:[#allocation5 + $0x2c] sm:$0xf]
        %v262 = vld [vmem:[#allocation5 + $0x30] sm:$0xf]
        %v263 = vld [vmem:[#allocation5 + $0x34] sm:$0xf]
        %v264 = vld [vmem:[#allocation5 + $0x38] sm:$0xf]
        %v265 = vld [vmem:[#allocation5 + $0x3c] sm:$0xf]
        %v266 = vld [vmem:[%s239] sm:$0x1]
        %v268 = vlaneseq
        %v269 = vshrl.u32 %v268, 7
        %v270 = vsub.s32 0, %v269
        %v271 = vrot.slane %v266, %v270
        %v281 = vunpack.c.l.b16 %v242
        %v282 = vunpack.c.l.b16 %v243
        %v283 = vunpack.c.l.b16 %v244
        %v284 = vunpack.c.l.b16 %v245
        %v285 = vunpack.c.l.b16 %v246
        %v286 = vunpack.c.l.b16 %v247
        %v287 = vunpack.c.l.b16 %v248
        %v288 = vunpack.c.l.b16 %v249
        %v289 = vpack.c.b16 %v282, %v281
        %v290 = vpack.c.b16 %v284, %v283
        %v291 = vpack.c.b16 %v286, %v285
        %v292 = vpack.c.b16 %v288, %v287
        %v313 = vunpack.c.l.b16 %v250
        %v314 = vunpack.c.l.b16 %v251
        %v315 = vunpack.c.l.b16 %v252
        %v316 = vunpack.c.l.b16 %v253
        %v317 = vunpack.c.l.b16 %v254
        %v318 = vunpack.c.l.b16 %v255
        %v319 = vunpack.c.l.b16 %v256
        %v320 = vunpack.c.l.b16 %v257
        %v321 = vunpack.c.l.b16 %v258
        %v322 = vunpack.c.l.b16 %v259
        %v323 = vunpack.c.l.b16 %v260
        %v324 = vunpack.c.l.b16 %v261
        %v325 = vunpack.c.l.b16 %v262
        %v326 = vunpack.c.l.b16 %v263
        %v327 = vunpack.c.l.b16 %v264
        %v328 = vunpack.c.l.b16 %v265
        %v329 = vpack.c.b16 %v314, %v313
        %v330 = vpack.c.b16 %v316, %v315
        %v331 = vpack.c.b16 %v318, %v317
        %v332 = vpack.c.b16 %v320, %v319
        %v333 = vpack.c.b16 %v322, %v321
        %v334 = vpack.c.b16 %v324, %v323
        %v335 = vpack.c.b16 %v326, %v325
        %v336 = vpack.c.b16 %v328, %v327
        %345 = vmatprep.subr.bf16.mxu0 0
        %346 = vmatpush1.bf16.msra.mxu0 %v329
        %347 = vmatprep.subr.bf16.mxu0 0
        %348 = vmatpush1.bf16.msra.mxu0 %v330
        %349 = vmatprep.subr.bf16.mxu0 0
        %350 = vmatpush1.bf16.msra.mxu0 %v331
        %351 = vmatprep.subr.bf16.mxu0 0
        %352 = vmatpush1.bf16.msra.mxu0 %v332
        %353 = vmatprep.subr.bf16.mxu0 0
        %354 = vmatpush1.bf16.msra.mxu0 %v333
        %355 = vmatprep.subr.bf16.mxu0 0
        %356 = vmatpush1.bf16.msra.mxu0 %v334
        %357 = vmatprep.subr.bf16.mxu0 0
        %358 = vmatpush1.bf16.msra.mxu0 %v335
        %359 = vmatprep.subr.bf16.mxu0 0
        %360 = vmatpush1.bf16.msra.mxu0 %v336
        %361 = vmatprep.subr.bf16.mxu0 0
        %362 = vmatpush1.bf16.msra.mxu0 0
        %363 = vmatprep.subr.bf16.mxu0 0
        %364 = vmatpush1.bf16.msra.mxu0 0
        %365 = vmatprep.subr.bf16.mxu0 0
        %366 = vmatpush1.bf16.msra.mxu0 0
        %367 = vmatprep.subr.bf16.mxu0 0
        %368 = vmatpush1.bf16.msra.mxu0 0
        %369 = vmatprep.subr.bf16.mxu0 0
        %370 = vmatpush1.bf16.msra.mxu0 0
        %371 = vmatprep.subr.bf16.mxu0 0
        %372 = vmatpush1.bf16.msra.mxu0 0
        %373 = vmatprep.subr.bf16.mxu0 0
        %374 = vmatpush1.bf16.msra.mxu0 0
        %375 = vmatprep.subr.bf16.mxu0 0
        %376 = vmatpush1.bf16.msra.mxu0 0
        %377 = vmatprep.mubr.bf16.mxu0 0
        %378 = vmatmul.mubr.bf16.gmra.mrb[0].mxu0 %v289
        %v379 = vpop.f32.mrb[0].mxu0
        %v380 = vadd.f32 %v271, %v379
        %v381 = vpop.f32.mrb[0].mxu0
        %v382 = vpop.f32.mrb[0].mxu0
        %v383 = vadd.f32 %v271, %v382
        %v384 = vpop.f32.mrb[0].mxu0
        %385 = vmatprep.mubr.bf16.mxu0 0
        %386 = vmatmul.mubr.bf16.gmra.mrb[0].mxu0 %v290
        %v387 = vpop.f32.mrb[0].mxu0
        %v388 = vadd.f32 %v271, %v387
        %v389 = vpop.f32.mrb[0].mxu0
        %v390 = vpop.f32.mrb[0].mxu0
        %v391 = vadd.f32 %v271, %v390
        %v392 = vpop.f32.mrb[0].mxu0
        %393 = vmatprep.mubr.bf16.mxu0 0
        %394 = vmatmul.mubr.bf16.gmra.mrb[0].mxu0 %v291
        %v395 = vpop.f32.mrb[0].mxu0
        %v396 = vadd.f32 %v271, %v395
        %v397 = vpop.f32.mrb[0].mxu0
        %v398 = vpop.f32.mrb[0].mxu0
        %v399 = vadd.f32 %v271, %v398
        %v400 = vpop.f32.mrb[0].mxu0
        %401 = vmatprep.mubr.bf16.mxu0 0
        %402 = vmatmul.mubr.bf16.gmra.mrb[0].mxu0 %v292
        %v403 = vpop.f32.mrb[0].mxu0
        %v404 = vadd.f32 %v271, %v403
        %v405 = vpop.f32.mrb[0].mxu0
        %v406 = vpop.f32.mrb[0].mxu0
        %v407 = vadd.f32 %v271, %v406
        %v408 = vpop.f32.mrb[0].mxu0
        %409 = vdwg.mxu0
        %v410 = vmax.f32 %v380, 0.0
        %v411 = vmax.f32 %v383, 0.0
        %v412 = vmax.f32 %v388, 0.0
        %v413 = vmax.f32 %v391, 0.0
        %v414 = vmax.f32 %v396, 0.0
        %v415 = vmax.f32 %v399, 0.0
        %v416 = vmax.f32 %v404, 0.0
        %v417 = vmax.f32 %v407, 0.0
        %v418 = vpack.c.bf16 %v411, %v410
        %v419 = vpack.c.bf16 %v413, %v412
        %v420 = vpack.c.bf16 %v415, %v414
        %v421 = vpack.c.bf16 %v417, %v416
        %v426 = vunpack.c.l.b16 %v418
        %v427 = vunpack.c.h.b16 %v418
        %v428 = vunpack.c.l.b16 %v419
        %v429 = vunpack.c.h.b16 %v419
        %v430 = vunpack.c.l.b16 %v420
        %v431 = vunpack.c.h.b16 %v420
        %v432 = vunpack.c.l.b16 %v421
        %v433 = vunpack.c.h.b16 %v421
        %v434 = vpack.c.b16 %v426, %v426
        %v435 = vpack.c.b16 %v427, %v427
        %v436 = vpack.c.b16 %v428, %v428
        %v437 = vpack.c.b16 %v429, %v429
        %v438 = vpack.c.b16 %v430, %v430
        %v439 = vpack.c.b16 %v431, %v431
        %v440 = vpack.c.b16 %v432, %v432
        %v441 = vpack.c.b16 %v433, %v433
        %450 = vst [vmem:[%s235] sm:$0xf] %v434
        %451 = vst [vmem:[%s235 + $0x4] sm:$0xf] %v435
        %452 = vst [vmem:[%s235 + $0x8] sm:$0xf] %v436
        %453 = vst [vmem:[%s235 + $0xc] sm:$0xf] %v437
        %454 = vst [vmem:[%s235 + $0x10] sm:$0xf] %v438
        %455 = vst [vmem:[%s235 + $0x14] sm:$0xf] %v439
        %456 = vst [vmem:[%s235 + $0x18] sm:$0xf] %v440
        %457 = vst [vmem:[%s235 + $0x1c] sm:$0xf] %v441
        %s458 = sand.u32 %s121, 1
        %s459 = scalar_lea.sflag [#allocation4], %s458
        %s460 = sand.u32 %s121, 1
        %s461 = smul.addr %s460, 32
        %s462 = scalar_lea.vmem [#allocation7], %s461
        // Predicated region
        $region41: #{tpu_custom_call.1} parent=31 // pred_check
          %p463 = pneg %p131
        $region42: #{tpu_custom_call.1} parent=31 // pred_check_branch
          %465 = sbr.rel (%p463) target = $region44
        $region43: #{tpu_custom_call.1} parent=31 // pred_region
          %s466 = smul.u32 8, %s25
          %s468 = ssub.s32 512, 512
          %469 = vsyncadd %s459, %s468
          %s470 = sadd.s32 %s26, %s466
          %s471 = smul.addr %s470, 64
          %s472 = scalar_lea.hbm %s3, %s471
          %s473 = sshll.u32 %s462, 4
          %s474 = int_to_ptr.vmem [resolvable:$true] %s473
          %479 = dma.vmem_to_hbm [thread:$0]  %s474, 512, %s472, %s459, 64, 64, 4
        $region44: #{tpu_custom_call.1} parent=31 // pred_fallthru
          _
      $region32: #{tpu_custom_call.1} parent=5 // pred_fallthru
        _
      %p480 = scmp.le.s32.totalorder 2, %s16
      // Predicated region
      $region45: #{tpu_custom_call.1} parent=5 // pred_check
        %p481 = pneg %p480
      $region46: #{tpu_custom_call.1} parent=5 // pred_check_branch
        %483 = sbr.rel (%p481) target = $region48
      $region47: #{tpu_custom_call.1} parent=5 // pred_region
        %s484 = ssub.s32 %s16, 2
        // Predicated region
        $region49: #{tpu_custom_call.1} parent=47 // pred_check
          %p485 = pneg %p137
        $region50: #{tpu_custom_call.1} parent=47 // pred_check_branch
          %487 = sbr.rel (%p485) target = $region52
        $region51: #{tpu_custom_call.1} parent=47 // pred_region
          %s488 = sand.u32 %s122, 1
          %s489 = scalar_lea.sflag [#allocation4], %s488
          %s490 = sand.u32 %s122, 1
          %s491 = smul.addr %s490, 32
          %s492 = scalar_lea.vmem [#allocation7], %s491
          %493 = dma.done %s489, 512
        $region52: #{tpu_custom_call.1} parent=47 // pred_fallthru
          _
      $region48: #{tpu_custom_call.1} parent=5 // pred_fallthru
        _
    $region6: #{tpu_custom_call.1} parent=1 // loop_footer
      %s20 = sadd.s32 1, %s16
    $region7: #{tpu_custom_call.1} parent=1 // loop_footer_branch
      %15 = sbr.rel target = $region3
    $region8: #{tpu_custom_call.1} parent=1 // loop_exit
      _
    %494 = vsyncpa [#allocation3], 1
    %s495 = scalar_lea.sflag [#allocation3], 1
    %496 = vsyncpa %s495, 1
    %497 = vsyncpa [#allocation6], 1
    %498 = vsyncpa [#allocation4], 1
    %s499 = scalar_lea.sflag [#allocation4], 1
    %500 = vsyncpa %s499, 1

</llo_original>
